<compile_context>
chip_gen: v5e
topology: v5e:2x2
jax: 0.10.0
libtpu: 0.0.40
codegen_flags: <defaults>
</compile_context>

<pallas_src>
import jax
import jax.numpy as jnp
from jax.experimental import pallas as pl
from jax.experimental.pallas import tpu as pltpu

# Module hyper-parameters (small, consistent with PolicyConfig semantics)
INPUT_DIM = 32          # config.input_dim
HIDDEN_DIM = 32         # config.hidden_dim
H2 = HIDDEN_DIM // 2    # context_processor output dim (16)
OUTPUT_DIM = 10         # config.output_dim
NUM_LAYERS = 3          # config.num_layers
CONTEXT_DIM = 64        # hard-coded context_dim in DynamicScalingPolicy
LN_EPS = 1e-5           # PyTorch LayerNorm default eps

# ---- packed weight-slab row layout ----
# w16 slab: (96, 16)  rows [0:64) = wc (context proj), [64:96) = fused heads
W16_WC = 0
W16_HEADS = CONTEXT_DIM
# w32 slab: (144, 32) rows [0:48) = fused input projection, then 3 x (32,32) layers
W32_WIN = 0
W32_L0 = INPUT_DIM + H2         # 48
# bvec slab: (16, 32)
ROW_BC, ROW_GC, ROW_BEC = 0, 1, 2
ROW_BI = 3
ROW_BL, ROW_GL, ROW_BEL = 4, 7, 10
ROW_BH = 13

# ---- packed output column layout (single lane-dense (B, 128) slab) ----
COL_H = 0                             # hidden_states   [0, 32)
COL_C = HIDDEN_DIM                    # context_features[32, 48)
COL_LOGITS = COL_C + H2               # scaled logits   [48, 58)
COL_RAW = COL_LOGITS + OUTPUT_DIM     # raw logits      [58, 68)
COL_VAL = COL_RAW + OUTPUT_DIM        # 68
COL_CONF = COL_VAL + 1                # 69
COL_TEMP = COL_CONF + 1               # 70
USED_COLS = COL_TEMP + 1              # 71
OUT_COLS = 128                        # pad to lane-dense width


def _layer_norm(h, gamma, beta):
    # one-pass moments: both cross-lane reductions issue back-to-back,
    # then gamma*rsqrt folded into a single scale.
    mean = jnp.mean(h, axis=-1, keepdims=True)
    mean2 = jnp.mean(h * h, axis=-1, keepdims=True)
    var = mean2 - mean * mean
    scale = gamma * jax.lax.rsqrt(var + LN_EPS)
    return (h - mean) * scale + beta


def _policy_kernel(x_ref, ctx_ref, w16_ref, w32_ref, bvec_ref, out_ref):
    x = x_ref[...]            # (B, 32)
    ctx = ctx_ref[...]        # (B, 64)
    bvec = bvec_ref[...]      # (16, 32)

    # --- context_processor: Linear(64 -> 16) + LayerNorm + ReLU (+ Dropout=id) ---
    wc = w16_ref[W16_WC:W16_WC + CONTEXT_DIM, :]                       # (64, 16)
    c = jnp.dot(ctx, wc, preferred_element_type=jnp.float32) + bvec[ROW_BC:ROW_BC + 1, 0:H2]
    c = _layer_norm(c, bvec[ROW_GC:ROW_GC + 1, 0:H2], bvec[ROW_BEC:ROW_BEC + 1, 0:H2])
    c = jnp.maximum(c, 0.0)

    # --- fused input_projection on concat([x, c], -1): one (B,48)@(48,32) dot ---
    w_in = w32_ref[W32_WIN:W32_WIN + INPUT_DIM + H2, :]                # (48, 32)
    xc = jnp.concatenate([x, c], axis=-1)                              # (B, 48)
    h = jnp.dot(xc, w_in, preferred_element_type=jnp.float32) + bvec[ROW_BI:ROW_BI + 1, :]

    # --- main_network: NUM_LAYERS x [Linear, LayerNorm, ReLU, Dropout=id] ---
    for i in range(NUM_LAYERS):
        r0 = W32_L0 + i * HIDDEN_DIM
        wl = w32_ref[r0:r0 + HIDDEN_DIM, :]                            # (32, 32)
        h = jnp.dot(h, wl, preferred_element_type=jnp.float32) + bvec[ROW_BL + i:ROW_BL + i + 1, :]
        h = _layer_norm(h,
                        bvec[ROW_GL + i:ROW_GL + i + 1, :],
                        bvec[ROW_BEL + i:ROW_BEL + i + 1, :])
        h = jnp.maximum(h, 0.0)

    # --- fused heads: one (32,16) matmul, cols = [raw(10)|conf|val|temp|pad(3)] ---
    wh = w16_ref[W16_HEADS:W16_HEADS + HIDDEN_DIM, :]                  # (32, 16)
    heads = jnp.dot(h, wh, preferred_element_type=jnp.float32) + bvec[ROW_BH:ROW_BH + 1, 0:16]

    raw = heads[:, 0:OUTPUT_DIM]                                       # (B, 10)
    conf = jax.nn.sigmoid(heads[:, OUTPUT_DIM:OUTPUT_DIM + 1])         # (B, 1)
    val = heads[:, OUTPUT_DIM + 1:OUTPUT_DIM + 2]                      # (B, 1)
    temp = jax.nn.softplus(heads[:, OUTPUT_DIM + 2:OUTPUT_DIM + 3]) + 0.1
    logits = raw * pl.reciprocal(temp, approx=True)                    # temp >= 0.1, safe

    # --- single lane-dense packed output (one unmasked store, one output DMA) ---
    pad = jnp.zeros((x.shape[0], OUT_COLS - USED_COLS), jnp.float32)
    out_ref[...] = jnp.concatenate([h, c, logits, raw, val, conf, temp, pad], axis=-1)


def init_params(key):
    """Deterministic synthetic parameter init (PyTorch-style uniform fan-in bound)."""
    ks = jax.random.split(key, 16)

    def lin(k, fan_in, shape):
        bound = 1.0 / float(fan_in) ** 0.5
        return jax.random.uniform(k, shape, jnp.float32, -bound, bound)

    total_in = INPUT_DIM + H2
    p = {}
    p['wc'] = lin(ks[0], CONTEXT_DIM, (CONTEXT_DIM, H2))
    p['bc'] = lin(ks[1], CONTEXT_DIM, (1, H2))
    p['gc'] = jnp.ones((1, H2), jnp.float32)
    p['bec'] = jnp.zeros((1, H2), jnp.float32)
    p['wix'] = lin(ks[2], total_in, (INPUT_DIM, HIDDEN_DIM))
    p['wic'] = lin(ks[3], total_in, (H2, HIDDEN_DIM))
    p['bi'] = lin(ks[4], total_in, (1, HIDDEN_DIM))
    p['wl'] = lin(ks[5], HIDDEN_DIM, (NUM_LAYERS, HIDDEN_DIM, HIDDEN_DIM))
    p['bl'] = lin(ks[6], HIDDEN_DIM, (NUM_LAYERS, 1, HIDDEN_DIM))
    p['gl'] = jnp.ones((NUM_LAYERS, 1, HIDDEN_DIM), jnp.float32)
    p['bel'] = jnp.zeros((NUM_LAYERS, 1, HIDDEN_DIM), jnp.float32)
    p['ws'] = lin(ks[7], HIDDEN_DIM, (HIDDEN_DIM, OUTPUT_DIM))
    p['bs'] = lin(ks[8], HIDDEN_DIM, (1, OUTPUT_DIM))
    p['wconf'] = lin(ks[9], HIDDEN_DIM, (HIDDEN_DIM, 1))
    p['bconf'] = lin(ks[10], HIDDEN_DIM, (1, 1))
    p['wval'] = lin(ks[11], HIDDEN_DIM, (HIDDEN_DIM, 1))
    p['bval'] = lin(ks[12], HIDDEN_DIM, (1, 1))
    p['wtemp'] = lin(ks[13], HIDDEN_DIM, (HIDDEN_DIM, 1))
    p['btemp'] = lin(ks[14], HIDDEN_DIM, (1, 1))
    return p


def pack_params(p):
    """Pack the 21 module parameters into 3 VMEM slabs (done once, host-side)."""
    # 16-lane weights: context projection + fused heads (pad heads 13 -> 16 cols).
    w_heads = jnp.concatenate(
        [p['ws'], p['wconf'], p['wval'], p['wtemp'],
         jnp.zeros((HIDDEN_DIM, 3), jnp.float32)], axis=1)             # (32, 16)
    w16 = jnp.concatenate([p['wc'], w_heads], axis=0)                  # (96, 16)

    # 32-lane weights: fused input projection (x rows then c rows) + 3 main layers.
    w32 = jnp.concatenate(
        [p['wix'], p['wic'],
         p['wl'].reshape(NUM_LAYERS * HIDDEN_DIM, HIDDEN_DIM)], axis=0)  # (144, 32)

    def pad32(v):  # (1, k) -> (1, 32)
        return jnp.pad(v, ((0, 0), (0, HIDDEN_DIM - v.shape[1])))

    head_b = jnp.concatenate([p['bs'], p['bconf'], p['bval'], p['btemp']], axis=1)  # (1, 13)
    bvec = jnp.concatenate(
        [pad32(p['bc']), pad32(p['gc']), pad32(p['bec']),              # rows 0..2
         p['bi'],                                                      # row 3
         p['bl'].reshape(NUM_LAYERS, HIDDEN_DIM),                      # rows 4..6
         p['gl'].reshape(NUM_LAYERS, HIDDEN_DIM),                      # rows 7..9
         p['bel'].reshape(NUM_LAYERS, HIDDEN_DIM),                     # rows 10..12
         pad32(head_b),                                                # row 13
         jnp.zeros((2, HIDDEN_DIM), jnp.float32)], axis=0)             # rows 14..15
    return w16, w32, bvec


def dynamic_scaling_policy_forward(x, context_tensor, packed):
    """Fused DynamicScalingPolicy.forward (eval mode) in a single Pallas kernel."""
    w16, w32, bvec = packed
    B = x.shape[0]

    vmem = pl.BlockSpec(memory_space=pltpu.MemorySpace.VMEM)
    out = pl.pallas_call(
        _policy_kernel,
        out_shape=jax.ShapeDtypeStruct((B, OUT_COLS), jnp.float32),
        in_specs=[vmem] * 5,
        out_specs=vmem,
    )(x, context_tensor, w16, w32, bvec)

    return {
        'logits': out[:, COL_LOGITS:COL_LOGITS + OUTPUT_DIM],
        'raw_logits': out[:, COL_RAW:COL_RAW + OUTPUT_DIM],
        'values': out[:, COL_VAL],
        'confidence': out[:, COL_CONF],
        'temperature': out[:, COL_TEMP],
        'hidden_states': out[:, COL_H:COL_H + HIDDEN_DIM],
        'context_features': out[:, COL_C:COL_C + H2],
    }


if __name__ == "__main__":
    key = jax.random.PRNGKey(0)
    k_param, k_x = jax.random.split(key)

    params = init_params(k_param)
    packed = pack_params(params)

    B = 8
    x = jax.random.normal(k_x, (B, INPUT_DIM), jnp.float32)
    # context=None path in the PyTorch module -> context_tensor = zeros(B, 64)
    # TODO(synk): performance_history / get_performance_trend is host-side Python
    # state bookkeeping, not part of the tensor compute path; omitted here.
    ctx = jnp.zeros((B, CONTEXT_DIM), jnp.float32)

    out = dynamic_scaling_policy_forward(x, ctx, packed)
    jax.block_until_ready(out)

    assert out['logits'].shape == (B, OUTPUT_DIM)
    assert out['raw_logits'].shape == (B, OUTPUT_DIM)
    assert out['values'].shape == (B,)
    assert out['confidence'].shape == (B,)
    assert out['temperature'].shape == (B,)
    assert out['hidden_states'].shape == (B, HIDDEN_DIM)
    assert out['context_features'].shape == (B, H2)
    print("KERNEL_OK")
</pallas_src>

<mosaic_0001>
module attributes {stable_mosaic.version = 11 : i64} {
  func.func @_policy_kernel(%arg0: memref<8x32xf32, #tpu.memory_space<vmem>>, %arg1: memref<8x64xf32, #tpu.memory_space<vmem>>, %arg2: memref<96x16xf32, #tpu.memory_space<vmem>>, %arg3: memref<144x32xf32, #tpu.memory_space<vmem>>, %arg4: memref<16x32xf32, #tpu.memory_space<vmem>>, %arg5: memref<8x128xf32, #tpu.memory_space<vmem>>) attributes {dimension_semantics = [], scalar_prefetch = 0 : i64, scratch_operands = 0 : i64, tpu.core_type = #tpu.core_type<tc>} {
    %c0 = arith.constant 0 : index
    %c0_0 = arith.constant 0 : index
    %0 = vector.load %arg0[%c0, %c0_0] : memref<8x32xf32, #tpu.memory_space<vmem>>, vector<8x32xf32>
    %c0_1 = arith.constant 0 : index
    %c0_2 = arith.constant 0 : index
    %1 = vector.load %arg1[%c0_1, %c0_2] : memref<8x64xf32, #tpu.memory_space<vmem>>, vector<8x64xf32>
    %c0_3 = arith.constant 0 : index
    %c0_4 = arith.constant 0 : index
    %2 = vector.load %arg4[%c0_3, %c0_4] : memref<16x32xf32, #tpu.memory_space<vmem>>, vector<16x32xf32>
    %c0_5 = arith.constant 0 : index
    %c0_6 = arith.constant 0 : index
    %3 = vector.load %arg2[%c0_5, %c0_6] : memref<96x16xf32, #tpu.memory_space<vmem>>, vector<64x16xf32>
    %cst = arith.constant dense<0.000000e+00> : vector<8x16xf32>
    %4 = tpu.matmul %1, %3, %cst {dimension_numbers = #tpu.dot_dimension_numbers<[1], [0], [0], [1], [0, 0, 1, 1], [], []>} : vector<8x64xf32>, vector<64x16xf32>, vector<8x16xf32> -> vector<8x16xf32>
    %5 = vector.extract_strided_slice %2 {offsets = [0, 0], sizes = [1, 16], strides = [1, 1]} : vector<16x32xf32> to vector<1x16xf32>
    %6 = vector.broadcast %5 : vector<1x16xf32> to vector<8x16xf32>
    %7 = arith.addf %4, %6 : vector<8x16xf32>
    %8 = vector.extract_strided_slice %2 {offsets = [1, 0], sizes = [1, 16], strides = [1, 1]} : vector<16x32xf32> to vector<1x16xf32>
    %9 = vector.extract_strided_slice %2 {offsets = [2, 0], sizes = [1, 16], strides = [1, 1]} : vector<16x32xf32> to vector<1x16xf32>
    %cst_7 = arith.constant dense<0.000000e+00> : vector<8xf32>
    %10 = vector.multi_reduction <add>, %7, %cst_7 [1] : vector<8x16xf32> to vector<8xf32>
    %11 = vector.shape_cast %10 : vector<8xf32> to vector<8x1xf32>
    %cst_8 = arith.constant 1.600000e+01 : f32
    %12 = vector.broadcast %cst_8 : f32 to vector<8x1xf32>
    %13 = arith.divf %11, %12 : vector<8x1xf32>
    %14 = arith.mulf %7, %7 : vector<8x16xf32>
    %cst_9 = arith.constant dense<0.000000e+00> : vector<8xf32>
    %15 = vector.multi_reduction <add>, %14, %cst_9 [1] : vector<8x16xf32> to vector<8xf32>
    %16 = vector.shape_cast %15 : vector<8xf32> to vector<8x1xf32>
    %cst_10 = arith.constant 1.600000e+01 : f32
    %17 = vector.broadcast %cst_10 : f32 to vector<8x1xf32>
    %18 = arith.divf %16, %17 : vector<8x1xf32>
    %19 = arith.mulf %13, %13 : vector<8x1xf32>
    %20 = arith.subf %18, %19 : vector<8x1xf32>
    %cst_11 = arith.constant 9.99999974E-6 : f32
    %21 = vector.broadcast %cst_11 : f32 to vector<8x1xf32>
    %22 = arith.addf %20, %21 : vector<8x1xf32>
    %23 = math.rsqrt %22 : vector<8x1xf32>
    %24 = vector.broadcast %8 : vector<1x16xf32> to vector<8x16xf32>
    %25 = vector.broadcast %23 : vector<8x1xf32> to vector<8x16xf32>
    %26 = arith.mulf %24, %25 : vector<8x16xf32>
    %27 = vector.broadcast %13 : vector<8x1xf32> to vector<8x16xf32>
    %28 = arith.subf %7, %27 : vector<8x16xf32>
    %29 = arith.mulf %28, %26 : vector<8x16xf32>
    %30 = vector.broadcast %9 : vector<1x16xf32> to vector<8x16xf32>
    %31 = arith.addf %29, %30 : vector<8x16xf32>
    %cst_12 = arith.constant 0.000000e+00 : f32
    %32 = vector.broadcast %cst_12 : f32 to vector<8x16xf32>
    %33 = arith.maximumf %31, %32 : vector<8x16xf32>
    %c0_13 = arith.constant 0 : index
    %c0_14 = arith.constant 0 : index
    %34 = vector.load %arg3[%c0_13, %c0_14] : memref<144x32xf32, #tpu.memory_space<vmem>>, vector<48x32xf32>
    %35 = tpu.concatenate %0, %33 in 1 : vector<8x32xf32>, vector<8x16xf32> -> vector<8x48xf32>
    %cst_15 = arith.constant dense<0.000000e+00> : vector<8x32xf32>
    %36 = tpu.matmul %35, %34, %cst_15 {dimension_numbers = #tpu.dot_dimension_numbers<[1], [0], [0], [1], [0, 0, 1, 1], [], []>} : vector<8x48xf32>, vector<48x32xf32>, vector<8x32xf32> -> vector<8x32xf32>
    %37 = vector.extract_strided_slice %2 {offsets = [3, 0], sizes = [1, 32], strides = [1, 1]} : vector<16x32xf32> to vector<1x32xf32>
    %38 = vector.broadcast %37 : vector<1x32xf32> to vector<8x32xf32>
    %39 = arith.addf %36, %38 : vector<8x32xf32>
    %c48 = arith.constant 48 : index
    %c0_16 = arith.constant 0 : index
    %40 = vector.load %arg3[%c48, %c0_16] : memref<144x32xf32, #tpu.memory_space<vmem>>, vector<32x32xf32>
    %cst_17 = arith.constant dense<0.000000e+00> : vector<8x32xf32>
    %41 = tpu.matmul %39, %40, %cst_17 {dimension_numbers = #tpu.dot_dimension_numbers<[1], [0], [0], [1], [0, 0, 1, 1], [], []>} : vector<8x32xf32>, vector<32x32xf32>, vector<8x32xf32> -> vector<8x32xf32>
    %42 = vector.extract_strided_slice %2 {offsets = [4, 0], sizes = [1, 32], strides = [1, 1]} : vector<16x32xf32> to vector<1x32xf32>
    %43 = vector.broadcast %42 : vector<1x32xf32> to vector<8x32xf32>
    %44 = arith.addf %41, %43 : vector<8x32xf32>
    %45 = vector.extract_strided_slice %2 {offsets = [7, 0], sizes = [1, 32], strides = [1, 1]} : vector<16x32xf32> to vector<1x32xf32>
    %46 = vector.extract_strided_slice %2 {offsets = [10, 0], sizes = [1, 32], strides = [1, 1]} : vector<16x32xf32> to vector<1x32xf32>
    %cst_18 = arith.constant dense<0.000000e+00> : vector<8xf32>
    %47 = vector.multi_reduction <add>, %44, %cst_18 [1] : vector<8x32xf32> to vector<8xf32>
    %48 = vector.shape_cast %47 : vector<8xf32> to vector<8x1xf32>
    %cst_19 = arith.constant 3.200000e+01 : f32
    %49 = vector.broadcast %cst_19 : f32 to vector<8x1xf32>
    %50 = arith.divf %48, %49 : vector<8x1xf32>
    %51 = arith.mulf %44, %44 : vector<8x32xf32>
    %cst_20 = arith.constant dense<0.000000e+00> : vector<8xf32>
    %52 = vector.multi_reduction <add>, %51, %cst_20 [1] : vector<8x32xf32> to vector<8xf32>
    %53 = vector.shape_cast %52 : vector<8xf32> to vector<8x1xf32>
    %cst_21 = arith.constant 3.200000e+01 : f32
    %54 = vector.broadcast %cst_21 : f32 to vector<8x1xf32>
    %55 = arith.divf %53, %54 : vector<8x1xf32>
    %56 = arith.mulf %50, %50 : vector<8x1xf32>
    %57 = arith.subf %55, %56 : vector<8x1xf32>
    %cst_22 = arith.constant 9.99999974E-6 : f32
    %58 = vector.broadcast %cst_22 : f32 to vector<8x1xf32>
    %59 = arith.addf %57, %58 : vector<8x1xf32>
    %60 = math.rsqrt %59 : vector<8x1xf32>
    %61 = vector.broadcast %45 : vector<1x32xf32> to vector<8x32xf32>
    %62 = vector.broadcast %60 : vector<8x1xf32> to vector<8x32xf32>
    %63 = arith.mulf %61, %62 : vector<8x32xf32>
    %64 = vector.broadcast %50 : vector<8x1xf32> to vector<8x32xf32>
    %65 = arith.subf %44, %64 : vector<8x32xf32>
    %66 = arith.mulf %65, %63 : vector<8x32xf32>
    %67 = vector.broadcast %46 : vector<1x32xf32> to vector<8x32xf32>
    %68 = arith.addf %66, %67 : vector<8x32xf32>
    %cst_23 = arith.constant 0.000000e+00 : f32
    %69 = vector.broadcast %cst_23 : f32 to vector<8x32xf32>
    %70 = arith.maximumf %68, %69 : vector<8x32xf32>
    %c80 = arith.constant 80 : index
    %c0_24 = arith.constant 0 : index
    %71 = vector.load %arg3[%c80, %c0_24] : memref<144x32xf32, #tpu.memory_space<vmem>>, vector<32x32xf32>
    %cst_25 = arith.constant dense<0.000000e+00> : vector<8x32xf32>
    %72 = tpu.matmul %70, %71, %cst_25 {dimension_numbers = #tpu.dot_dimension_numbers<[1], [0], [0], [1], [0, 0, 1, 1], [], []>} : vector<8x32xf32>, vector<32x32xf32>, vector<8x32xf32> -> vector<8x32xf32>
    %73 = vector.extract_strided_slice %2 {offsets = [5, 0], sizes = [1, 32], strides = [1, 1]} : vector<16x32xf32> to vector<1x32xf32>
    %74 = vector.broadcast %73 : vector<1x32xf32> to vector<8x32xf32>
    %75 = arith.addf %72, %74 : vector<8x32xf32>
    %76 = vector.extract_strided_slice %2 {offsets = [8, 0], sizes = [1, 32], strides = [1, 1]} : vector<16x32xf32> to vector<1x32xf32>
    %77 = vector.extract_strided_slice %2 {offsets = [11, 0], sizes = [1, 32], strides = [1, 1]} : vector<16x32xf32> to vector<1x32xf32>
    %cst_26 = arith.constant dense<0.000000e+00> : vector<8xf32>
    %78 = vector.multi_reduction <add>, %75, %cst_26 [1] : vector<8x32xf32> to vector<8xf32>
    %79 = vector.shape_cast %78 : vector<8xf32> to vector<8x1xf32>
    %cst_27 = arith.constant 3.200000e+01 : f32
    %80 = vector.broadcast %cst_27 : f32 to vector<8x1xf32>
    %81 = arith.divf %79, %80 : vector<8x1xf32>
    %82 = arith.mulf %75, %75 : vector<8x32xf32>
    %cst_28 = arith.constant dense<0.000000e+00> : vector<8xf32>
    %83 = vector.multi_reduction <add>, %82, %cst_28 [1] : vector<8x32xf32> to vector<8xf32>
    %84 = vector.shape_cast %83 : vector<8xf32> to vector<8x1xf32>
    %cst_29 = arith.constant 3.200000e+01 : f32
    %85 = vector.broadcast %cst_29 : f32 to vector<8x1xf32>
    %86 = arith.divf %84, %85 : vector<8x1xf32>
    %87 = arith.mulf %81, %81 : vector<8x1xf32>
    %88 = arith.subf %86, %87 : vector<8x1xf32>
    %cst_30 = arith.constant 9.99999974E-6 : f32
    %89 = vector.broadcast %cst_30 : f32 to vector<8x1xf32>
    %90 = arith.addf %88, %89 : vector<8x1xf32>
    %91 = math.rsqrt %90 : vector<8x1xf32>
    %92 = vector.broadcast %76 : vector<1x32xf32> to vector<8x32xf32>
    %93 = vector.broadcast %91 : vector<8x1xf32> to vector<8x32xf32>
    %94 = arith.mulf %92, %93 : vector<8x32xf32>
    %95 = vector.broadcast %81 : vector<8x1xf32> to vector<8x32xf32>
    %96 = arith.subf %75, %95 : vector<8x32xf32>
    %97 = arith.mulf %96, %94 : vector<8x32xf32>
    %98 = vector.broadcast %77 : vector<1x32xf32> to vector<8x32xf32>
    %99 = arith.addf %97, %98 : vector<8x32xf32>
    %cst_31 = arith.constant 0.000000e+00 : f32
    %100 = vector.broadcast %cst_31 : f32 to vector<8x32xf32>
    %101 = arith.maximumf %99, %100 : vector<8x32xf32>
    %c112 = arith.constant 112 : index
    %c0_32 = arith.constant 0 : index
    %102 = vector.load %arg3[%c112, %c0_32] : memref<144x32xf32, #tpu.memory_space<vmem>>, vector<32x32xf32>
    %cst_33 = arith.constant dense<0.000000e+00> : vector<8x32xf32>
    %103 = tpu.matmul %101, %102, %cst_33 {dimension_numbers = #tpu.dot_dimension_numbers<[1], [0], [0], [1], [0, 0, 1, 1], [], []>} : vector<8x32xf32>, vector<32x32xf32>, vector<8x32xf32> -> vector<8x32xf32>
    %104 = vector.extract_strided_slice %2 {offsets = [6, 0], sizes = [1, 32], strides = [1, 1]} : vector<16x32xf32> to vector<1x32xf32>
    %105 = vector.broadcast %104 : vector<1x32xf32> to vector<8x32xf32>
    %106 = arith.addf %103, %105 : vector<8x32xf32>
    %107 = vector.extract_strided_slice %2 {offsets = [9, 0], sizes = [1, 32], strides = [1, 1]} : vector<16x32xf32> to vector<1x32xf32>
    %108 = vector.extract_strided_slice %2 {offsets = [12, 0], sizes = [1, 32], strides = [1, 1]} : vector<16x32xf32> to vector<1x32xf32>
    %cst_34 = arith.constant dense<0.000000e+00> : vector<8xf32>
    %109 = vector.multi_reduction <add>, %106, %cst_34 [1] : vector<8x32xf32> to vector<8xf32>
    %110 = vector.shape_cast %109 : vector<8xf32> to vector<8x1xf32>
    %cst_35 = arith.constant 3.200000e+01 : f32
    %111 = vector.broadcast %cst_35 : f32 to vector<8x1xf32>
    %112 = arith.divf %110, %111 : vector<8x1xf32>
    %113 = arith.mulf %106, %106 : vector<8x32xf32>
    %cst_36 = arith.constant dense<0.000000e+00> : vector<8xf32>
    %114 = vector.multi_reduction <add>, %113, %cst_36 [1] : vector<8x32xf32> to vector<8xf32>
    %115 = vector.shape_cast %114 : vector<8xf32> to vector<8x1xf32>
    %cst_37 = arith.constant 3.200000e+01 : f32
    %116 = vector.broadcast %cst_37 : f32 to vector<8x1xf32>
    %117 = arith.divf %115, %116 : vector<8x1xf32>
    %118 = arith.mulf %112, %112 : vector<8x1xf32>
    %119 = arith.subf %117, %118 : vector<8x1xf32>
    %cst_38 = arith.constant 9.99999974E-6 : f32
    %120 = vector.broadcast %cst_38 : f32 to vector<8x1xf32>
    %121 = arith.addf %119, %120 : vector<8x1xf32>
    %122 = math.rsqrt %121 : vector<8x1xf32>
    %123 = vector.broadcast %107 : vector<1x32xf32> to vector<8x32xf32>
    %124 = vector.broadcast %122 : vector<8x1xf32> to vector<8x32xf32>
    %125 = arith.mulf %123, %124 : vector<8x32xf32>
    %126 = vector.broadcast %112 : vector<8x1xf32> to vector<8x32xf32>
    %127 = arith.subf %106, %126 : vector<8x32xf32>
    %128 = arith.mulf %127, %125 : vector<8x32xf32>
    %129 = vector.broadcast %108 : vector<1x32xf32> to vector<8x32xf32>
    %130 = arith.addf %128, %129 : vector<8x32xf32>
    %cst_39 = arith.constant 0.000000e+00 : f32
    %131 = vector.broadcast %cst_39 : f32 to vector<8x32xf32>
    %132 = arith.maximumf %130, %131 : vector<8x32xf32>
    %c64 = arith.constant 64 : index
    %c0_40 = arith.constant 0 : index
    %133 = vector.load %arg2[%c64, %c0_40] : memref<96x16xf32, #tpu.memory_space<vmem>>, vector<32x16xf32>
    %cst_41 = arith.constant dense<0.000000e+00> : vector<8x16xf32>
    %134 = tpu.matmul %132, %133, %cst_41 {dimension_numbers = #tpu.dot_dimension_numbers<[1], [0], [0], [1], [0, 0, 1, 1], [], []>} : vector<8x32xf32>, vector<32x16xf32>, vector<8x16xf32> -> vector<8x16xf32>
    %135 = vector.extract_strided_slice %2 {offsets = [13, 0], sizes = [1, 16], strides = [1, 1]} : vector<16x32xf32> to vector<1x16xf32>
    %136 = vector.broadcast %135 : vector<1x16xf32> to vector<8x16xf32>
    %137 = arith.addf %134, %136 : vector<8x16xf32>
    %138 = vector.extract_strided_slice %137 {offsets = [0, 0], sizes = [8, 10], strides = [1, 1]} : vector<8x16xf32> to vector<8x10xf32>
    %139 = vector.extract_strided_slice %137 {offsets = [0, 10], sizes = [8, 1], strides = [1, 1]} : vector<8x16xf32> to vector<8x1xf32>
    %140 = arith.negf %139 : vector<8x1xf32>
    %141 = math.exp %140 : vector<8x1xf32>
    %cst_42 = arith.constant 1.000000e+00 : f32
    %142 = vector.broadcast %cst_42 : f32 to vector<8x1xf32>
    %143 = arith.addf %142, %141 : vector<8x1xf32>
    %144 = arith.divf %142, %143 : vector<8x1xf32>
    %145 = vector.extract_strided_slice %137 {offsets = [0, 11], sizes = [8, 1], strides = [1, 1]} : vector<8x16xf32> to vector<8x1xf32>
    %146 = vector.extract_strided_slice %137 {offsets = [0, 12], sizes = [8, 1], strides = [1, 1]} : vector<8x16xf32> to vector<8x1xf32>
    %cst_43 = arith.constant 0.000000e+00 : f32
    %147 = vector.broadcast %cst_43 : f32 to vector<8x1xf32>
    %148 = arith.maximumf %146, %147 : vector<8x1xf32>
    %149 = vector.broadcast %cst_43 : f32 to vector<8x1xf32>
    %150 = arith.subf %146, %149 : vector<8x1xf32>
    %151 = arith.cmpf one, %150, %150 : vector<8x1xf32>
    %152 = vector.broadcast %cst_43 : f32 to vector<8x1xf32>
    %153 = arith.addf %146, %152 : vector<8x1xf32>
    %154 = math.absf %150 : vector<8x1xf32>
    %cst_44 = arith.constant 0.000000e+00 : f32
    %155 = vector.broadcast %cst_44 : f32 to vector<8x1xf32>
    %156 = arith.subf %155, %154 : vector<8x1xf32>
    %157 = math.exp %156 : vector<8x1xf32>
    %158 = math.log1p %157 : vector<8x1xf32>
    %159 = arith.addf %148, %158 : vector<8x1xf32>
    %160 = arith.select %151, %153, %159 : vector<8x1xi1>, vector<8x1xf32>
    %cst_45 = arith.constant 1.000000e-01 : f32
    %161 = vector.broadcast %cst_45 : f32 to vector<8x1xf32>
    %162 = arith.addf %160, %161 : vector<8x1xf32>
    %163 = tpu.reciprocal %162 {approx = true} : vector<8x1xf32> -> vector<8x1xf32>
    %164 = vector.broadcast %163 : vector<8x1xf32> to vector<8x10xf32>
    %165 = arith.mulf %138, %164 : vector<8x10xf32>
    %cst_46 = arith.constant 0.000000e+00 : f32
    %166 = vector.broadcast %cst_46 : f32 to vector<8x57xf32>
    %167 = tpu.concatenate %132, %33, %165, %138, %145, %144, %162, %166 in 1 : vector<8x32xf32>, vector<8x16xf32>, vector<8x10xf32>, vector<8x10xf32>, vector<8x1xf32>, vector<8x1xf32>, vector<8x1xf32>, vector<8x57xf32> -> vector<8x128xf32>
    %c0_47 = arith.constant 0 : index
    %c0_48 = arith.constant 0 : index
    %168 = vector.load %arg5[%c0_47, %c0_48] : memref<8x128xf32, #tpu.memory_space<vmem>>, vector<8x128xf32>
    tpu.vector_store %arg5[%c0_47, %c0_48], %167 {strides = array<i32>} : memref<8x128xf32, #tpu.memory_space<vmem>>, vector<8x128xf32>,
    return
  }
}

</mosaic_0001>

<llo_original>
// kernel: tpu_custom_call.1
$region0: #{tpu_custom_call.1}
  #allocation0 [shape = 'u32[]', space=smem, size = 0x4, offset = 0x4, fixed_abs, tag = 'smem constant byte address 0x4 - core index']
  #allocation1 [shape = 'u32[72,128]{1,0:T(1,128)}', space=vmem, size = 0x9000, scoped, tag = 'internal scratch']
  %s0 = inlined_call_operand.vmem [shape: f32[8,32], index: 0, kind: input, shape index: {}]
  %s1 = inlined_call_operand.vmem [shape: f32[8,64], index: 1, kind: input, shape index: {}]
  %s2 = inlined_call_operand.vmem [shape: f32[96,16], index: 2, kind: input, shape index: {}]
  %s3 = inlined_call_operand.vmem [shape: f32[144,32], index: 3, kind: input, shape index: {}]
  %s4 = inlined_call_operand.vmem [shape: f32[16,32], index: 4, kind: input, shape index: {}]
  %s5 = inlined_call_operand.hbm [shape: f32[8,128], index: 5, kind: output, shape index: {}]
  %s6 = sld [smem:[#allocation0]]
  $region30: #{tpu_custom_call.1} parent=0
    _
  %s8 = ssub.s32 1, %s6
  %s9 = scalar_select 0, %s8, %s6
  $region1: #{tpu_custom_call.1} parent=0
    #allocation2 [shape = 'u8[4096]{0}', space=vmem, size = 0x1000, scoped, tag = 'output window, operand 0, single buffered']
    #allocation3 [shape = 's32[1]{0}', space=sflag, size = 0x4, scoped, tag = 'scoped memory for tpu_custom_call.1']
    %10 = vsyncpa [#allocation3], 0
    // Predicated region
    $region2: #{tpu_custom_call.1} parent=1 // pred_check
      _
    $region3: #{tpu_custom_call.1} parent=1 // pred_check_branch
      %12 = sbr.rel (0) target = $region5
    $region4: #{tpu_custom_call.1} parent=1 // pred_region
      _
    $region5: #{tpu_custom_call.1} parent=1 // pred_fallthru
      _
    // Predicated region
    $region6: #{tpu_custom_call.1} parent=1 // pred_check
      _
    $region7: #{tpu_custom_call.1} parent=1 // pred_check_branch
      %14 = sbr.rel (0) target = $region9
    $region8: #{tpu_custom_call.1} parent=1 // pred_region
      _
    $region9: #{tpu_custom_call.1} parent=1 // pred_fallthru
      _
    // Predicated region
    $region10: #{tpu_custom_call.1} parent=1 // pred_check
      _
    $region11: #{tpu_custom_call.1} parent=1 // pred_check_branch
      %16 = sbr.rel (0) target = $region13
    $region12: #{tpu_custom_call.1} parent=1 // pred_region
      _
    $region13: #{tpu_custom_call.1} parent=1 // pred_fallthru
      _
    // Predicated region
    $region14: #{tpu_custom_call.1} parent=1 // pred_check
      _
    $region15: #{tpu_custom_call.1} parent=1 // pred_check_branch
      %18 = sbr.rel (0) target = $region17
    $region16: #{tpu_custom_call.1} parent=1 // pred_region
      _
    $region17: #{tpu_custom_call.1} parent=1 // pred_fallthru
      _
    // Predicated region
    $region18: #{tpu_custom_call.1} parent=1 // pred_check
      _
    $region19: #{tpu_custom_call.1} parent=1 // pred_check_branch
      %20 = sbr.rel (0) target = $region21
    $region20: #{tpu_custom_call.1} parent=1 // pred_region
      _
    $region21: #{tpu_custom_call.1} parent=1 // pred_fallthru
      _
    %v21 = vld [vmem:[%s0] sm:$0xff]
    %v22 = vld [vmem:[%s1] sm:$0xff]
    %v23 = vld [vmem:[%s4] sm:$0xff]
    %v24 = vld [vmem:[%s4 + $0x8] sm:$0xff]
    %v25 = vld [vmem:[%s2] sm:$0xff]
    %v26 = vld [vmem:[%s2 + $0x8] sm:$0xff]
    %v27 = vld [vmem:[%s2 + $0x10] sm:$0xff]
    %v28 = vld [vmem:[%s2 + $0x18] sm:$0xff]
    %v29 = vld [vmem:[%s2 + $0x20] sm:$0xff]
    %v30 = vld [vmem:[%s2 + $0x28] sm:$0xff]
    %v31 = vld [vmem:[%s2 + $0x30] sm:$0xff]
    %v32 = vld [vmem:[%s2 + $0x38] sm:$0xff]
    %v33 = vperm.slane %v23, 0
    %vm34 = vcmask 523264
    %v36 = vsel %vm34, %v22, 0
    %38 = vmatpush.msra.mxu0 0.0
    %39 = vmatpush.msra.mxu0 0.0
    %40 = vmatpush.msra.mxu0 0.0
    %41 = vmatpush.msra.mxu0 0.0
    %42 = vmatpush.msra.mxu0 0.0
    %43 = vmatpush.msra.mxu0 0.0
    %44 = vmatpush.msra.mxu0 0.0
    %45 = vmatpush.msra.mxu0 0.0
    %46 = vmatpush.msra.mxu0 %v32
    %47 = vmatpush.msra.mxu0 %v31
    %48 = vmatpush.msra.mxu0 %v30
    %49 = vmatpush.msra.mxu0 %v29
    %50 = vmatpush.msra.mxu0 %v28
    %51 = vmatpush.msra.mxu0 %v27
    %52 = vmatpush.msra.mxu0 %v26
    %53 = vmatpush.msra.mxu0 %v25
    %54 = vmatmul.f32.gmra.mxu0 %v36
    %v55 = vpop.f32.mrf.mxu0
    %v56 = vadd.f32 %v33, %v55
    %57 = vdwg.mxu0
    %vm58 = vcmask 130048
    %v59 = vsel %vm58, %v56, 0.0
    %60 = vadd.xlane.f32.xlu0 %v59
    %v61 = vpop.xlane.xlu0 %60
    %v62 = vrcp.pop 16.0
    %v63 = vmul.f32 16.0, %v62
    %v64 = vsub.f32 1.0, %v63
    %v65 = vmul.f32 %v62, %v64
    %v66 = vadd.f32 %v62, %v65
    %vm67 = vweird.f32 %v62
    %v68 = vsel %vm67, %v62, %v66
    %v69 = vmul.f32 %v61, %v68
    %v70 = vmul.f32 %v56, %v56
    %v71 = vsel %vm58, %v70, 0.0
    %72 = vadd.xlane.f32.xlu0 %v71
    %v73 = vpop.xlane.xlu0 %72
    %v74 = vmul.f32 %v73, %v68
    %v75 = vmul.f32 %v69, %v69
    %v76 = vsub.f32 %v74, %v75
    %v77 = vadd.f32 %v76, 1e-05
    %v78 = vrsqrt.pop %v77
    %v79 = vmul.f32 %v78, %v77
    %v80 = vmul.f32 %v79, %v78
    %v81 = vmul.f32 0.5, %v80
    %v82 = vsub.f32 1.5, %v81
    %v83 = vmul.f32 %v78, %v82
    %vm84 = vweird.f32 %v77
    %vm85 = vweird.f32 %v78
    %vm86 = vmor %vm84, %vm85
    %v87 = vsel %vm86, %v78, %v83
    %v88 = vperm.slane %v23, 1
    %v89 = vmul.f32 %v88, %v87
    %v90 = vsub.f32 %v56, %v69
    %v91 = vmul.f32 %v90, %v89
    %v92 = vperm.slane %v23, 2
    %v93 = vadd.f32 %v91, %v92
    %v94 = vmax.f32 %v93, 0.0
    %v95 = vld [vmem:[%s3] sm:$0xff]
    %v96 = vld [vmem:[%s3 + $0x8] sm:$0xff]
    %v97 = vld [vmem:[%s3 + $0x10] sm:$0xff]
    %v98 = vld [vmem:[%s3 + $0x18] sm:$0xff]
    %v99 = vld [vmem:[%s3 + $0x20] sm:$0xff]
    %v100 = vld [vmem:[%s3 + $0x28] sm:$0xff]
    %102 = vrot.lane.b32.xlu0 %v94, 32
    %v103 = vpop.permute.xlu0 %102
    %vm105 = vcmask 261120
    %v106 = vsel %vm105, %v21, %v103
    %v107 = vperm.slane %v23, 3
    %vm108 = vcmask 392192
    %v110 = vsel %vm108, %v106, 0
    %112 = vmatpush.msra.mxu0 0.0
    %113 = vmatpush.msra.mxu0 0.0
    %114 = vmatpush.msra.mxu0 0.0
    %115 = vmatpush.msra.mxu0 0.0
    %116 = vmatpush.msra.mxu0 0.0
    %117 = vmatpush.msra.mxu0 0.0
    %118 = vmatpush.msra.mxu0 0.0
    %119 = vmatpush.msra.mxu0 0.0
    %120 = vmatpush.msra.mxu0 0.0
    %121 = vmatpush.msra.mxu0 0.0
    %122 = vmatpush.msra.mxu0 %v100
    %123 = vmatpush.msra.mxu0 %v99
    %124 = vmatpush.msra.mxu0 %v98
    %125 = vmatpush.msra.mxu0 %v97
    %126 = vmatpush.msra.mxu0 %v96
    %127 = vmatpush.msra.mxu0 %v95
    %128 = vmatmul.f32.gmra.mxu0 %v110
    %v129 = vpop.f32.mrf.mxu0
    %v130 = vadd.f32 %v107, %v129
    %131 = vdwg.mxu0
    %v132 = vld [vmem:[%s3 + $0x30] sm:$0xff]
    %v133 = vld [vmem:[%s3 + $0x38] sm:$0xff]
    %v134 = vld [vmem:[%s3 + $0x40] sm:$0xff]
    %v135 = vld [vmem:[%s3 + $0x48] sm:$0xff]
    %v136 = vperm.slane %v23, 4
    %v138 = vsel %vm105, %v130, 0
    %140 = vmatpush.msra.mxu0 0.0
    %141 = vmatpush.msra.mxu0 0.0
    %142 = vmatpush.msra.mxu0 0.0
    %143 = vmatpush.msra.mxu0 0.0
    %144 = vmatpush.msra.mxu0 0.0
    %145 = vmatpush.msra.mxu0 0.0
    %146 = vmatpush.msra.mxu0 0.0
    %147 = vmatpush.msra.mxu0 0.0
    %148 = vmatpush.msra.mxu0 0.0
    %149 = vmatpush.msra.mxu0 0.0
    %150 = vmatpush.msra.mxu0 0.0
    %151 = vmatpush.msra.mxu0 0.0
    %152 = vmatpush.msra.mxu0 %v135
    %153 = vmatpush.msra.mxu0 %v134
    %154 = vmatpush.msra.mxu0 %v133
    %155 = vmatpush.msra.mxu0 %v132
    %156 = vmatmul.f32.gmra.mxu0 %v138
    %v157 = vpop.f32.mrf.mxu0
    %v158 = vadd.f32 %v136, %v157
    %159 = vdwg.mxu0
    %v160 = vsel %vm105, %v158, 0.0
    %161 = vadd.xlane.f32.xlu0 %v160
    %v162 = vpop.xlane.xlu0 %161
    %v163 = vrcp.pop 32.0
    %v164 = vmul.f32 32.0, %v163
    %v165 = vsub.f32 1.0, %v164
    %v166 = vmul.f32 %v163, %v165
    %v167 = vadd.f32 %v163, %v166
    %vm168 = vweird.f32 %v163
    %v169 = vsel %vm168, %v163, %v167
    %v170 = vmul.f32 %v162, %v169
    %v171 = vmul.f32 %v158, %v158
    %v172 = vsel %vm105, %v171, 0.0
    %173 = vadd.xlane.f32.xlu0 %v172
    %v174 = vpop.xlane.xlu0 %173
    %v175 = vmul.f32 %v174, %v169
    %v176 = vmul.f32 %v170, %v170
    %v177 = vsub.f32 %v175, %v176
    %v178 = vadd.f32 %v177, 1e-05
    %v179 = vrsqrt.pop %v178
    %v180 = vmul.f32 %v179, %v178
    %v181 = vmul.f32 %v180, %v179
    %v182 = vmul.f32 0.5, %v181
    %v183 = vsub.f32 1.5, %v182
    %v184 = vmul.f32 %v179, %v183
    %vm185 = vweird.f32 %v178
    %vm186 = vweird.f32 %v179
    %vm187 = vmor %vm185, %vm186
    %v188 = vsel %vm187, %v179, %v184
    %v189 = vperm.slane %v23, 7
    %v190 = vmul.f32 %v189, %v188
    %v191 = vsub.f32 %v158, %v170
    %v192 = vmul.f32 %v191, %v190
    %v193 = vperm.slane %v24, 2
    %v194 = vadd.f32 %v192, %v193
    %v195 = vmax.f32 %v194, 0.0
    %v196 = vld [vmem:[%s3 + $0x50] sm:$0xff]
    %v197 = vld [vmem:[%s3 + $0x58] sm:$0xff]
    %v198 = vld [vmem:[%s3 + $0x60] sm:$0xff]
    %v199 = vld [vmem:[%s3 + $0x68] sm:$0xff]
    %v200 = vperm.slane %v23, 5
    %v202 = vsel %vm105, %v195, 0
    %204 = vmatpush.msra.mxu0 0.0
    %205 = vmatpush.msra.mxu0 0.0
    %206 = vmatpush.msra.mxu0 0.0
    %207 = vmatpush.msra.mxu0 0.0
    %208 = vmatpush.msra.mxu0 0.0
    %209 = vmatpush.msra.mxu0 0.0
    %210 = vmatpush.msra.mxu0 0.0
    %211 = vmatpush.msra.mxu0 0.0
    %212 = vmatpush.msra.mxu0 0.0
    %213 = vmatpush.msra.mxu0 0.0
    %214 = vmatpush.msra.mxu0 0.0
    %215 = vmatpush.msra.mxu0 0.0
    %216 = vmatpush.msra.mxu0 %v199
    %217 = vmatpush.msra.mxu0 %v198
    %218 = vmatpush.msra.mxu0 %v197
    %219 = vmatpush.msra.mxu0 %v196
    %220 = vmatmul.f32.gmra.mxu0 %v202
    %v221 = vpop.f32.mrf.mxu0
    %v222 = vadd.f32 %v200, %v221
    %223 = vdwg.mxu0
    %v224 = vsel %vm105, %v222, 0.0
    %225 = vadd.xlane.f32.xlu0 %v224
    %v226 = vpop.xlane.xlu0 %225
    %v227 = vmul.f32 %v226, %v169
    %v228 = vmul.f32 %v222, %v222
    %v229 = vsel %vm105, %v228, 0.0
    %230 = vadd.xlane.f32.xlu0 %v229
    %v231 = vpop.xlane.xlu0 %230
    %v232 = vmul.f32 %v231, %v169
    %v233 = vmul.f32 %v227, %v227
    %v234 = vsub.f32 %v232, %v233
    %v235 = vadd.f32 %v234, 1e-05
    %v236 = vrsqrt.pop %v235
    %v237 = vmul.f32 %v236, %v235
    %v238 = vmul.f32 %v237, %v236
    %v239 = vmul.f32 0.5, %v238
    %v240 = vsub.f32 1.5, %v239
    %v241 = vmul.f32 %v236, %v240
    %vm242 = vweird.f32 %v235
    %vm243 = vweird.f32 %v236
    %vm244 = vmor %vm242, %vm243
    %v245 = vsel %vm244, %v236, %v241
    %v246 = vperm.slane %v24, 0
    %v247 = vmul.f32 %v246, %v245
    %v248 = vsub.f32 %v222, %v227
    %v249 = vmul.f32 %v248, %v247
    %v250 = vperm.slane %v24, 3
    %v251 = vadd.f32 %v249, %v250
    %v252 = vmax.f32 %v251, 0.0
    %v253 = vld [vmem:[%s3 + $0x70] sm:$0xff]
    %v254 = vld [vmem:[%s3 + $0x78] sm:$0xff]
    %v255 = vld [vmem:[%s3 + $0x80] sm:$0xff]
    %v256 = vld [vmem:[%s3 + $0x88] sm:$0xff]
    %v257 = vperm.slane %v23, 6
    %v259 = vsel %vm105, %v252, 0
    %261 = vmatpush.msra.mxu0 0.0
    %262 = vmatpush.msra.mxu0 0.0
    %263 = vmatpush.msra.mxu0 0.0
    %264 = vmatpush.msra.mxu0 0.0
    %265 = vmatpush.msra.mxu0 0.0
    %266 = vmatpush.msra.mxu0 0.0
    %267 = vmatpush.msra.mxu0 0.0
    %268 = vmatpush.msra.mxu0 0.0
    %269 = vmatpush.msra.mxu0 0.0
    %270 = vmatpush.msra.mxu0 0.0
    %271 = vmatpush.msra.mxu0 0.0
    %272 = vmatpush.msra.mxu0 0.0
    %273 = vmatpush.msra.mxu0 %v256
    %274 = vmatpush.msra.mxu0 %v255
    %275 = vmatpush.msra.mxu0 %v254
    %276 = vmatpush.msra.mxu0 %v253
    %277 = vmatmul.f32.gmra.mxu0 %v259
    %v278 = vpop.f32.mrf.mxu0
    %v279 = vadd.f32 %v257, %v278
    %280 = vdwg.mxu0
    %v281 = vsel %vm105, %v279, 0.0
    %282 = vadd.xlane.f32.xlu0 %v281
    %v283 = vpop.xlane.xlu0 %282
    %v284 = vmul.f32 %v283, %v169
    %v285 = vmul.f32 %v279, %v279
    %v286 = vsel %vm105, %v285, 0.0
    %287 = vadd.xlane.f32.xlu0 %v286
    %v288 = vpop.xlane.xlu0 %287
    %v289 = vmul.f32 %v288, %v169
    %v290 = vmul.f32 %v284, %v284
    %v291 = vsub.f32 %v289, %v290
    %v292 = vadd.f32 %v291, 1e-05
    %v293 = vrsqrt.pop %v292
    %v294 = vmul.f32 %v293, %v292
    %v295 = vmul.f32 %v294, %v293
    %v296 = vmul.f32 0.5, %v295
    %v297 = vsub.f32 1.5, %v296
    %v298 = vmul.f32 %v293, %v297
    %vm299 = vweird.f32 %v292
    %vm300 = vweird.f32 %v293
    %vm301 = vmor %vm299, %vm300
    %v302 = vsel %vm301, %v293, %v298
    %v303 = vperm.slane %v24, 1
    %v304 = vmul.f32 %v303, %v302
    %v305 = vsub.f32 %v279, %v284
    %v306 = vmul.f32 %v305, %v304
    %v307 = vperm.slane %v24, 4
    %v308 = vadd.f32 %v306, %v307
    %v309 = vmax.f32 %v308, 0.0
    %v310 = vld [vmem:[%s2 + $0x40] sm:$0xff]
    %v311 = vld [vmem:[%s2 + $0x48] sm:$0xff]
    %v312 = vld [vmem:[%s2 + $0x50] sm:$0xff]
    %v313 = vld [vmem:[%s2 + $0x58] sm:$0xff]
    %v314 = vperm.slane %v24, 5
    %v316 = vsel %vm105, %v309, 0
    %318 = vmatpush.msra.mxu0 0.0
    %319 = vmatpush.msra.mxu0 0.0
    %320 = vmatpush.msra.mxu0 0.0
    %321 = vmatpush.msra.mxu0 0.0
    %322 = vmatpush.msra.mxu0 0.0
    %323 = vmatpush.msra.mxu0 0.0
    %324 = vmatpush.msra.mxu0 0.0
    %325 = vmatpush.msra.mxu0 0.0
    %326 = vmatpush.msra.mxu0 0.0
    %327 = vmatpush.msra.mxu0 0.0
    %328 = vmatpush.msra.mxu0 0.0
    %329 = vmatpush.msra.mxu0 0.0
    %330 = vmatpush.msra.mxu0 %v313
    %331 = vmatpush.msra.mxu0 %v312
    %332 = vmatpush.msra.mxu0 %v311
    %333 = vmatpush.msra.mxu0 %v310
    %334 = vmatmul.f32.gmra.mxu0 %v316
    %v335 = vpop.f32.mrf.mxu0
    %v336 = vadd.f32 %v314, %v335
    %337 = vdwg.mxu0
    %v338 = vxor.u32 %v336, 2147483648
    %v339 = vmul.f32 %v338, 1.442695
    %v340 = vpow.pop %v339
    %v341 = vadd.f32 %v340, 1.0
    %v342 = vrcp.pop %v341
    %v343 = vmul.f32 %v341, %v342
    %v344 = vsub.f32 1.0, %v343
    %v345 = vmul.f32 %v342, %v344
    %v346 = vadd.f32 %v342, %v345
    %vm347 = vweird.f32 %v341
    %vm348 = vweird.f32 %v342
    %vm349 = vmor %vm347, %vm348
    %v350 = vsel %vm349, %v342, %v346
    %v351 = vand.u32 2147483647, %v341
    %vm352 = vcmp.eq.f32.partialorder %v351, 8.507059e+37
    %v353 = vand.u32 %v341, 2147483648
    %v354 = vor.u32 1.1754944e-38, %v353
    %v355 = vsel %vm352, %v354, %v350
    %v356 = vmul.f32 1.0, %v355
    %v357 = vmax.f32 %v336, 0.0
    %vm358 = vcmp.ne.f32.partialorder %v336, %v336
    %v359 = vadd.f32 %v336, 0.0
    %v360 = vand.u32 2147483647, %v336
    %v361 = vsub.f32 0.0, %v360
    %v362 = vmul.f32 %v361, 1.442695
    %v363 = vpow.pop %v362
    %v364 = vadd.f32 %v363, 1.0
    %v365 = vlog2.pop %v364
    %v366 = vmul.f32 %v365, 0.6931472
    %v367 = vmul.f32 -0.5, %v363
    %v368 = vadd.f32 %v367, 1.0
    %v369 = vmul.f32 %v368, %v363
    %v370 = vand.u32 2147483647, %v363
    %vm371 = vcmp.lt.f32.partialorder %v370, 0.0004427343
    %v372 = vsel %vm371, %v369, %v366
    %v373 = vadd.f32 %v357, %v372
    %v374 = vsel %vm358, %v359, %v373
    %v375 = vadd.f32 %v374, 0.1
    %v376 = vrcp.pop %v375
    %378 = vset.pattern.permute.xlu0 12
    %379 = vperm.xlu0 %378, %v376
    %v380 = vpop.permute.xlu0 %379
    %v382 = vmul.f32 %v336, %v380
    %384 = vrot.lane.b32.xlu0 %v382, 48
    %v385 = vpop.permute.xlu0 %384
    %388 = vrot.lane.b32.xlu0 %v336, 58
    %v389 = vpop.permute.xlu0 %388
    %391 = vrot.lane.b32.xlu0 %v336, 57
    %v392 = vpop.permute.xlu0 %391
    %395 = vrot.lane.b32.xlu0 %v356, 59
    %v396 = vpop.permute.xlu0 %395
    %399 = vrot.lane.b32.xlu0 %v375, 58
    %v400 = vpop.permute.xlu0 %399
    %v402 = vsel %vm105, %v309, %v103
    %v403 = vsel %vm108, %v402, %v385
    %vm404 = vcmask 474112
    %v405 = vsel %vm404, %v403, %v389
    %vm406 = vcmask 556032
    %v407 = vsel %vm406, %v405, %v392
    %vm408 = vcmask 564224
    %v409 = vsel %vm408, %v407, %v396
    %vm410 = vcmask 572416
    %v411 = vsel %vm410, %v409, %v400
    %vm412 = vcmask 580608
    %v413 = vsel %vm412, %v411, 0.0
    %414 = vst [vmem:[#allocation2] sm:$0xff] %v413
    // Predicated region
    $region22: #{tpu_custom_call.1} parent=1 // pred_check
      _
    $region23: #{tpu_custom_call.1} parent=1 // pred_check_branch
      %416 = sbr.rel (0) target = $region25
    $region24: #{tpu_custom_call.1} parent=1 // pred_region
      %418 = vsyncadd [#allocation3], 0
      %s420 = sshll.u32 [#allocation2], 4
      %s421 = int_to_ptr.vmem [resolvable:$true] %s420
      %s422 = sshll.u32 %s5, 4
      %s423 = int_to_ptr.hbm [resolvable:$true] %s422
      %425 = dma.vmem_to_hbm [thread:$0]  %s421, 128, %s423, [#allocation3]
    $region25: #{tpu_custom_call.1} parent=1 // pred_fallthru
      _
    // Predicated region
    $region26: #{tpu_custom_call.1} parent=1 // pred_check
      _
    $region27: #{tpu_custom_call.1} parent=1 // pred_check_branch
      %427 = sbr.rel (0) target = $region29
    $region28: #{tpu_custom_call.1} parent=1 // pred_region
      %429 = dma.done [#allocation3], 128
    $region29: #{tpu_custom_call.1} parent=1 // pred_fallthru
      _
    %430 = vsyncpa [#allocation3], 1

</llo_original>
